<compile_context>
chip_gen: v6e
topology: v6e:2x2x1
jax: 0.10.0
libtpu: 0.0.40
codegen_flags: <defaults>
</compile_context>

<pallas_src>
import math
from functools import partial

import jax
import jax.numpy as jnp
from jax.experimental import pallas as pl
from jax.experimental.pallas import tpu as pltpu


def _round_up(n, m):
    return (n + m - 1) // m * m


def _gelu_exact(x):
    # torch nn.GELU() default (approximate='none'): 0.5*x*(1+erf(x/sqrt(2)))
    return 0.5 * x * (1.0 + jax.lax.erf(x * (1.0 / math.sqrt(2.0))))


def _gelu_tanh(x):
    c = math.sqrt(2.0 / math.pi)
    return 0.5 * x * (1.0 + jnp.tanh(c * (x + 0.044715 * x * x * x)))


def _vmem_capacity_bytes(default=64 << 20):
    """Physical per-core VMEM; conservative 64 MiB fallback (v7x-safe)."""
    try:
        cap = int(pltpu.get_tpu_info().vmem_capacity_bytes)
        if cap > 0:
            return cap
    except Exception:
        pass
    return default


def _mlp_kernel(x_ref, w1_ref, b1_ref, w2_ref, b2_ref, g_ref, beta_ref,
                o_ref, acc_ref, *, add_residual: bool, eps: float,
                final_dim: int, use_tanh_gelu: bool):
    gelu = _gelu_tanh if use_tanh_gelu else _gelu_exact
    k = pl.program_id(1)

    @pl.when(k == 0)
    def _init():
        acc_ref[...] = jnp.zeros_like(acc_ref)

    # fc -> GELU -> fc2 for this hidden chunk (bf16 MXU operands, f32 acc).
    xc = x_ref[...].astype(w1_ref.dtype)
    h = jnp.dot(xc, w1_ref[...], preferred_element_type=jnp.float32)
    h = gelu(h + b1_ref[...])
    acc_ref[...] += jnp.dot(h.astype(w2_ref.dtype), w2_ref[...],
                            preferred_element_type=jnp.float32)

    @pl.when(k == pl.num_programs(1) - 1)
    def _finalize():
        y = acc_ref[...] + b2_ref[...]
        if add_residual:                       # static: final_dim == start_dim
            y = y + x_ref[...].astype(jnp.float32)

        # LayerNorm over the true feature width (masked when padded to 128).
        fpad = y.shape[-1]
        inv_n = 1.0 / float(final_dim)
        if fpad != final_dim:
            mask = jax.lax.broadcasted_iota(jnp.int32, y.shape, 1) < final_dim
            y = jnp.where(mask, y, 0.0)
            mean = jnp.sum(y, axis=-1, keepdims=True) * inv_n
            centered = jnp.where(mask, y - mean, 0.0)
        else:
            mean = jnp.sum(y, axis=-1, keepdims=True) * inv_n
            centered = y - mean
        var = jnp.sum(centered * centered, axis=-1, keepdims=True) * inv_n
        normed = centered * jax.lax.rsqrt(var + eps) * g_ref[...] + beta_ref[...]
        o_ref[...] = gelu(normed).astype(o_ref.dtype)


def _choose_hidden_chunk(start_p, hidden_dim, final_p, vmem_cap, vmem_budget,
                         w_itemsize=2):
    """Return (hidden_chunk, hidden_pad).

    chunk == hidden_pad -> single k step (weights fetched once; resident-like,
    best on v5e/v6e).  chunk < hidden_pad -> weights streamed over the
    "arbitrary" grid axis (bounded VMEM; required at v7x/transformer scale).
    """
    target = 512 if vmem_cap >= (96 << 20) else 256
    if hidden_dim <= target:
        return hidden_dim, hidden_dim
    full_w = 2 * (start_p * hidden_dim + hidden_dim * final_p) * w_itemsize
    if (hidden_dim % 128 == 0 and hidden_dim <= 2048
            and full_w <= vmem_budget // 3):
        return hidden_dim, hidden_dim
    # Largest lane-aligned chunk <= target that divides hidden_dim.
    for c in range(target, 127, -128):
        if hidden_dim % c == 0:
            return c, hidden_dim
    # No clean divisor: pad hidden_dim (zero-padded W1 cols / b1 / W2 rows).
    return target, _round_up(hidden_dim, target)


def _choose_row_tile(rows, start_p, hidden_chunk, final_p, vmem_budget,
                     max_tile=1024, w_itemsize=2, min_steps=4):
    f32 = 4
    fixed = (2 * (start_p * hidden_chunk + hidden_chunk * final_p) * w_itemsize
             + 2 * (hidden_chunk + 3 * final_p) * f32)
    per_row = (2 * start_p * f32           # x double buffer
               + 3 * final_p * f32          # out double buffer + f32 accumulator
               + 4 * hidden_chunk * f32     # h (f32) + bf16 copy + erf temps
               + 2 * final_p * f32)         # LayerNorm temporaries
    avail = max(vmem_budget - fixed, 4 << 20)
    tm = max(8, min(max_tile, (avail // per_row) // 8 * 8))
    tm = min(tm, _round_up(rows, 8))
    # Keep >= min_steps row-grid steps (2 TensorCores on v7x -> 2 steps each).
    if rows >= min_steps * 8:
        tm = min(tm, max(8, _round_up(pl.cdiv(rows, min_steps), 8)))
    return int(tm)


def _vmem_limit_bytes(tm, start_p, hidden_chunk, final_p, w_itemsize, vmem_cap):
    f32 = 4
    need = (2 * tm * start_p * f32
            + 2 * tm * final_p * f32
            + tm * final_p * f32
            + 2 * (start_p * hidden_chunk + hidden_chunk * final_p) * w_itemsize
            + 2 * (hidden_chunk + 3 * final_p) * f32
            + 4 * tm * hidden_chunk * f32
            + 2 * tm * final_p * f32)
    limit = max(int(need * 1.5) + (8 << 20), 32 << 20)
    return int(min(limit, vmem_cap - (8 << 20)))   # never exceed physical VMEM


def mlp_forward(x, params, *, eps=1e-5, use_tanh_gelu=False,
                row_tile_max=1024, weights_dtype=jnp.bfloat16,
                hidden_chunk=None):
    """x: (B, S, start_dim) float32 -> (B, S, final_dim) float32."""
    w1, b1, w2, b2, gamma, beta = params
    B, S, start_dim = x.shape
    hidden_dim = w1.shape[1]
    final_dim = w2.shape[1]
    add_residual = (final_dim == start_dim)
    w_itemsize = jnp.dtype(weights_dtype).itemsize

    vmem_cap = _vmem_capacity_bytes()
    vmem_budget = int(0.5 * vmem_cap)

    # Lane-dense output: pad feature axis to a multiple of 128 (masked LN in
    # the kernel).  The residual add needs x on the same padded feature axis.
    final_pad = _round_up(final_dim, 128)
    pad_final = final_pad != final_dim
    start_pad = final_pad if (add_residual and pad_final) else start_dim

    if hidden_chunk is None:
        hidden_chunk, hidden_pad = _choose_hidden_chunk(
            start_pad, hidden_dim, final_pad, vmem_cap, vmem_budget, w_itemsize)
    else:
        hidden_pad = _round_up(hidden_dim, hidden_chunk)
    n_chunks = hidden_pad // hidden_chunk

    rows = B * S
    x2 = x.reshape(rows, start_dim)
    if start_pad != start_dim:
        x2 = jnp.pad(x2, ((0, 0), (0, start_pad - start_dim)))

    w1p = w1.astype(weights_dtype)
    w2p = w2.astype(weights_dtype)
    if start_pad != start_dim or hidden_pad != hidden_dim:
        w1p = jnp.pad(w1p, ((0, start_pad - start_dim),
                            (0, hidden_pad - hidden_dim)))
    if hidden_pad != hidden_dim or pad_final:
        w2p = jnp.pad(w2p, ((0, hidden_pad - hidden_dim),
                            (0, final_pad - final_dim)))
    b1p = b1.astype(jnp.float32).reshape(1, hidden_dim)
    if hidden_pad != hidden_dim:
        b1p = jnp.pad(b1p, ((0, 0), (0, hidden_pad - hidden_dim)))

    def _pad_f(v):
        v = v.astype(jnp.float32).reshape(1, final_dim)
        if pad_final:
            v = jnp.pad(v, ((0, 0), (0, final_pad - final_dim)))
        return v

    b2p, gp, betap = _pad_f(b2), _pad_f(gamma), _pad_f(beta)

    tm = _choose_row_tile(rows, start_pad, hidden_chunk, final_pad,
                          vmem_budget, max_tile=row_tile_max,
                          w_itemsize=w_itemsize)
    n_row_steps = pl.cdiv(rows, tm)
    grid = (n_row_steps, n_chunks)

    kernel = partial(_mlp_kernel, add_residual=add_residual, eps=float(eps),
                     final_dim=final_dim, use_tanh_gelu=use_tanh_gelu)

    flops = 2 * rows * (start_pad * hidden_pad + hidden_pad * final_pad)
    transcendentals = rows * (hidden_pad + final_pad)
    weight_bytes = (start_pad * hidden_pad + hidden_pad * final_pad) * w_itemsize
    weight_fetches = 1 if n_chunks == 1 else n_row_steps
    bytes_accessed = (rows * (start_pad + final_pad) * 4
                      + weight_fetches * weight_bytes
                      + (hidden_pad + 3 * final_pad) * 4)
    cost = pl.CostEstimate(flops=int(flops),
                           transcendentals=int(transcendentals),
                           bytes_accessed=int(bytes_accessed))

    vmem_limit = _vmem_limit_bytes(tm, start_pad, hidden_chunk, final_pad,
                                   w_itemsize, vmem_cap)

    in_specs = [
        pl.BlockSpec((tm, start_pad), lambda i, k: (i, 0)),            # x rows
        pl.BlockSpec((start_pad, hidden_chunk), lambda i, k: (0, k)),  # W1 chunk
        pl.BlockSpec((1, hidden_chunk), lambda i, k: (0, k)),          # b1 chunk
        pl.BlockSpec((hidden_chunk, final_pad), lambda i, k: (k, 0)),  # W2 chunk
        pl.BlockSpec((1, final_pad), lambda i, k: (0, 0)),             # b2
        pl.BlockSpec((1, final_pad), lambda i, k: (0, 0)),             # gamma
        pl.BlockSpec((1, final_pad), lambda i, k: (0, 0)),             # beta
    ]

    out = pl.pallas_call(
        kernel,
        out_shape=jax.ShapeDtypeStruct((rows, final_pad), x.dtype),
        grid_spec=pltpu.PrefetchScalarGridSpec(
            num_scalar_prefetch=0,
            grid=grid,
            in_specs=in_specs,
            out_specs=pl.BlockSpec((tm, final_pad), lambda i, k: (i, 0)),
            scratch_shapes=[pltpu.VMEM((tm, final_pad), jnp.float32)],
        ),
        compiler_params=pltpu.CompilerParams(
            dimension_semantics=("parallel", "arbitrary"),
            vmem_limit_bytes=vmem_limit),
        cost_estimate=cost,
    )(x2, w1p, b1p, w2p, b2p, gp, betap)

    if pad_final:
        out = out[:, :final_dim]
    return out.reshape(B, S, final_dim)


def init_mlp_params(key, start_dim, hidden_dim, final_dim, dtype=jnp.float32):
    """Deterministic init mimicking torch.nn.Linear defaults (uniform +-1/sqrt(fan_in))."""
    k1, k2, k3, k4 = jax.random.split(key, 4)
    lim1 = 1.0 / math.sqrt(start_dim)
    lim2 = 1.0 / math.sqrt(hidden_dim)
    w1 = jax.random.uniform(k1, (start_dim, hidden_dim), dtype, -lim1, lim1)
    b1 = jax.random.uniform(k2, (hidden_dim,), dtype, -lim1, lim1)
    w2 = jax.random.uniform(k3, (hidden_dim, final_dim), dtype, -lim2, lim2)
    b2 = jax.random.uniform(k4, (final_dim,), dtype, -lim2, lim2)
    gamma = jnp.ones((final_dim,), dtype)
    beta = jnp.zeros((final_dim,), dtype)
    return (w1, b1, w2, b2, gamma, beta)


def mlp_reference(x, params, eps=1e-5, weights_dtype=None):
    """Pure-JAX reference of the PyTorch forward.

    With weights_dtype=jnp.bfloat16 it mirrors the kernel's MXU casts
    (bf16 operands, f32 accumulation) for a tight numerical comparison.
    """
    w1, b1, w2, b2, gamma, beta = params
    if weights_dtype is not None:
        a1 = x.astype(weights_dtype)
        w1 = w1.astype(weights_dtype)
        w2 = w2.astype(weights_dtype)
    else:
        a1 = x
    t = jnp.dot(a1, w1, preferred_element_type=jnp.float32) + b1
    t = _gelu_exact(t)
    a2 = t.astype(weights_dtype) if weights_dtype is not None else t
    t = jnp.dot(a2, w2, preferred_element_type=jnp.float32) + b2
    if t.shape[2] == x.shape[2]:
        t = t + x
    mean = jnp.mean(t, axis=-1, keepdims=True)
    centered = t - mean
    var = jnp.mean(centered * centered, axis=-1, keepdims=True)
    n = centered * jax.lax.rsqrt(var + eps) * gamma + beta
    return _gelu_exact(n)


if __name__ == "__main__":
    key = jax.random.PRNGKey(0)

    # --- Case 1: residual path (final_dim == start_dim), padded to 128 lanes.
    B, S = 2, 8
    start_dim, hidden_dim, final_dim = 32, 64, 32
    kx, kp, key = jax.random.split(key, 3)
    x = jax.random.normal(kx, (B, S, start_dim), jnp.float32)
    params = init_mlp_params(kp, start_dim, hidden_dim, final_dim)

    out = jax.block_until_ready(mlp_forward(x, params))
    assert out.shape == (B, S, final_dim)
    ref_bf16 = mlp_reference(x, params, weights_dtype=jnp.bfloat16)
    assert jnp.allclose(out, ref_bf16, atol=2e-3, rtol=2e-3), \
        "case1: mismatch vs bf16-mirrored reference"
    ref_f32 = mlp_reference(x, params)
    assert jnp.allclose(out, ref_f32, atol=1.5e-1, rtol=1.5e-1), \
        "case1: mismatch vs f32 reference"

    # --- Case 2: no residual, multi-chunk hidden streaming (k-grid > 1),
    #             masked LayerNorm over a non-128 final_dim.
    start_dim, hidden_dim, final_dim = 48, 384, 64
    kx, kp, key = jax.random.split(key, 3)
    x2 = jax.random.normal(kx, (B, S, start_dim), jnp.float32)
    params2 = init_mlp_params(kp, start_dim, hidden_dim, final_dim)

    out2 = jax.block_until_ready(mlp_forward(x2, params2, hidden_chunk=128))
    assert out2.shape == (B, S, final_dim)
    ref2 = mlp_reference(x2, params2, weights_dtype=jnp.bfloat16)
    assert jnp.allclose(out2, ref2, atol=2e-3, rtol=2e-3), \
        "case2: mismatch vs bf16-mirrored reference"

    print("KERNEL_OK")
</pallas_src>

<mosaic_0001>
module attributes {stable_mosaic.version = 11 : i64} {
  func.func @_mlp_kernel(%arg0: i32, %arg1: i32, %arg2: memref<16x128xf32, #tpu.memory_space<vmem>>, %arg3: memref<128x64xbf16, #tpu.memory_space<vmem>>, %arg4: memref<1x64xf32, #tpu.memory_space<vmem>>, %arg5: memref<64x128xbf16, #tpu.memory_space<vmem>>, %arg6: memref<1x128xf32, #tpu.memory_space<vmem>>, %arg7: memref<1x128xf32, #tpu.memory_space<vmem>>, %arg8: memref<1x128xf32, #tpu.memory_space<vmem>>, %arg9: memref<16x128xf32, #tpu.memory_space<vmem>>, %arg10: memref<16x128xf32, #tpu.memory_space<vmem>>) attributes {dimension_semantics = [#tpu.dimension_semantics<parallel>, #tpu.dimension_semantics<arbitrary>], iteration_bounds = array<i64: 1, 1>, scalar_prefetch = 0 : i64, scratch_operands = 1 : i64, tpu.core_type = #tpu.core_type<tc>, window_params = [{transform_indices = @transform_0, window_bounds = array<i64: 16, 128>}, {transform_indices = @transform_1, window_bounds = array<i64: 128, 64>}, {transform_indices = @transform_2, window_bounds = array<i64: 1, 64>}, {transform_indices = @transform_3, window_bounds = array<i64: 64, 128>}, {pipeline_mode = #tpu.pipeline_mode<synchronous>, transform_indices = @transform_4, window_bounds = array<i64: 1, 128>}, {pipeline_mode = #tpu.pipeline_mode<synchronous>, transform_indices = @transform_5, window_bounds = array<i64: 1, 128>}, {pipeline_mode = #tpu.pipeline_mode<synchronous>, transform_indices = @transform_6, window_bounds = array<i64: 1, 128>}, {transform_indices = @transform_7, window_bounds = array<i64: 16, 128>}]} {
    %c0_i32 = arith.constant 0 : i32
    %0 = arith.cmpi eq, %arg1, %c0_i32 : i32
    %1 = arith.extui %0 : i1 to i32
    %c0_i32_0 = arith.constant 0 : i32
    %2 = arith.cmpi ne, %1, %c0_i32_0 : i32
    scf.if %2 {
      %cst_18 = arith.constant 0.000000e+00 : f32
      %27 = vector.broadcast %cst_18 : f32 to vector<16x128xf32>
      %c0_19 = arith.constant 0 : index
      %c0_20 = arith.constant 0 : index
      %28 = vector.load %arg10[%c0_19, %c0_20] : memref<16x128xf32, #tpu.memory_space<vmem>>, vector<16x128xf32>
      tpu.vector_store %arg10[%c0_19, %c0_20], %27 {strides = array<i32>} : memref<16x128xf32, #tpu.memory_space<vmem>>, vector<16x128xf32>,
    } else {
    }
    %c0 = arith.constant 0 : index
    %c0_1 = arith.constant 0 : index
    %3 = vector.load %arg2[%c0, %c0_1] : memref<16x128xf32, #tpu.memory_space<vmem>>, vector<16x128xf32>
    %4 = arith.truncf %3 : vector<16x128xf32> to vector<16x128xbf16>
    %c0_2 = arith.constant 0 : index
    %c0_3 = arith.constant 0 : index
    %5 = vector.load %arg3[%c0_2, %c0_3] : memref<128x64xbf16, #tpu.memory_space<vmem>>, vector<128x64xbf16>
    %cst = arith.constant dense<0.000000e+00> : vector<16x64xf32>
    %6 = tpu.matmul %4, %5, %cst {dimension_numbers = #tpu.dot_dimension_numbers<[1], [0], [0], [1], [0, 0, 1, 1], [], []>} : vector<16x128xbf16>, vector<128x64xbf16>, vector<16x64xf32> -> vector<16x64xf32>
    %c0_4 = arith.constant 0 : index
    %c0_5 = arith.constant 0 : index
    %7 = vector.load %arg4[%c0_4, %c0_5] : memref<1x64xf32, #tpu.memory_space<vmem>>, vector<1x64xf32>
    %8 = vector.broadcast %7 : vector<1x64xf32> to vector<16x64xf32>
    %9 = arith.addf %6, %8 : vector<16x64xf32>
    %cst_6 = arith.constant 5.000000e-01 : f32
    %10 = vector.broadcast %cst_6 : f32 to vector<16x64xf32>
    %11 = arith.mulf %10, %9 : vector<16x64xf32>
    %cst_7 = arith.constant 0.707106769 : f32
    %12 = vector.broadcast %cst_7 : f32 to vector<16x64xf32>
    %13 = arith.mulf %9, %12 : vector<16x64xf32>
    %14 = math.erf %13 : vector<16x64xf32>
    %cst_8 = arith.constant 1.000000e+00 : f32
    %15 = vector.broadcast %cst_8 : f32 to vector<16x64xf32>
    %16 = arith.addf %15, %14 : vector<16x64xf32>
    %17 = arith.mulf %11, %16 : vector<16x64xf32>
    %c0_9 = arith.constant 0 : index
    %c0_10 = arith.constant 0 : index
    %18 = vector.load %arg10[%c0_9, %c0_10] : memref<16x128xf32, #tpu.memory_space<vmem>>, vector<16x128xf32>
    %19 = arith.truncf %17 : vector<16x64xf32> to vector<16x64xbf16>
    %c0_11 = arith.constant 0 : index
    %c0_12 = arith.constant 0 : index
    %20 = vector.load %arg5[%c0_11, %c0_12] : memref<64x128xbf16, #tpu.memory_space<vmem>>, vector<64x128xbf16>
    %cst_13 = arith.constant dense<0.000000e+00> : vector<16x128xf32>
    %21 = tpu.matmul %19, %20, %cst_13 {dimension_numbers = #tpu.dot_dimension_numbers<[1], [0], [0], [1], [0, 0, 1, 1], [], []>} : vector<16x64xbf16>, vector<64x128xbf16>, vector<16x128xf32> -> vector<16x128xf32>
    %22 = arith.addf %18, %21 : vector<16x128xf32>
    %c0_14 = arith.constant 0 : index
    %c0_15 = arith.constant 0 : index
    %23 = vector.load %arg10[%c0_14, %c0_15] : memref<16x128xf32, #tpu.memory_space<vmem>>, vector<16x128xf32>
    tpu.vector_store %arg10[%c0_14, %c0_15], %22 {strides = array<i32>} : memref<16x128xf32, #tpu.memory_space<vmem>>, vector<16x128xf32>,
    %c0_i32_16 = arith.constant 0 : i32
    %24 = arith.cmpi eq, %arg1, %c0_i32_16 : i32
    %25 = arith.extui %24 : i1 to i32
    %c0_i32_17 = arith.constant 0 : i32
    %26 = arith.cmpi ne, %25, %c0_i32_17 : i32
    scf.if %26 {
      %c0_18 = arith.constant 0 : index
      %c0_19 = arith.constant 0 : index
      %27 = vector.load %arg10[%c0_18, %c0_19] : memref<16x128xf32, #tpu.memory_space<vmem>>, vector<16x128xf32>
      %c0_20 = arith.constant 0 : index
      %c0_21 = arith.constant 0 : index
      %28 = vector.load %arg6[%c0_20, %c0_21] : memref<1x128xf32, #tpu.memory_space<vmem>>, vector<1x128xf32>
      %29 = vector.broadcast %28 : vector<1x128xf32> to vector<16x128xf32>
      %30 = arith.addf %27, %29 : vector<16x128xf32>
      %c0_22 = arith.constant 0 : index
      %c0_23 = arith.constant 0 : index
      %31 = vector.load %arg2[%c0_22, %c0_23] : memref<16x128xf32, #tpu.memory_space<vmem>>, vector<16x128xf32>
      %32 = arith.addf %30, %31 : vector<16x128xf32>
      %33 = tpu.iota {dimensions = array<i32: 1>} : vector<16x128xi32>
      %c32_i32 = arith.constant 32 : i32
      %34 = vector.broadcast %c32_i32 : i32 to vector<16x128xi32>
      %35 = arith.cmpi slt, %33, %34 : vector<16x128xi32>
      %cst_24 = arith.constant 0.000000e+00 : f32
      %36 = vector.broadcast %cst_24 : f32 to vector<16x128xf32>
      %37 = arith.select %35, %32, %36 : vector<16x128xi1>, vector<16x128xf32>
      %cst_25 = arith.constant dense<0.000000e+00> : vector<16xf32>
      %38 = vector.multi_reduction <add>, %37, %cst_25 [1] : vector<16x128xf32> to vector<16xf32>
      %39 = vector.shape_cast %38 : vector<16xf32> to vector<16x1xf32>
      %cst_26 = arith.constant 3.125000e-02 : f32
      %40 = vector.broadcast %cst_26 : f32 to vector<16x1xf32>
      %41 = arith.mulf %39, %40 : vector<16x1xf32>
      %42 = vector.broadcast %41 : vector<16x1xf32> to vector<16x128xf32>
      %43 = arith.subf %37, %42 : vector<16x128xf32>
      %cst_27 = arith.constant 0.000000e+00 : f32
      %44 = vector.broadcast %cst_27 : f32 to vector<16x128xf32>
      %45 = arith.select %35, %43, %44 : vector<16x128xi1>, vector<16x128xf32>
      %46 = arith.mulf %45, %45 : vector<16x128xf32>
      %cst_28 = arith.constant dense<0.000000e+00> : vector<16xf32>
      %47 = vector.multi_reduction <add>, %46, %cst_28 [1] : vector<16x128xf32> to vector<16xf32>
      %48 = vector.shape_cast %47 : vector<16xf32> to vector<16x1xf32>
      %cst_29 = arith.constant 3.125000e-02 : f32
      %49 = vector.broadcast %cst_29 : f32 to vector<16x1xf32>
      %50 = arith.mulf %48, %49 : vector<16x1xf32>
      %cst_30 = arith.constant 9.99999974E-6 : f32
      %51 = vector.broadcast %cst_30 : f32 to vector<16x1xf32>
      %52 = arith.addf %50, %51 : vector<16x1xf32>
      %53 = math.rsqrt %52 : vector<16x1xf32>
      %54 = vector.broadcast %53 : vector<16x1xf32> to vector<16x128xf32>
      %55 = arith.mulf %45, %54 : vector<16x128xf32>
      %c0_31 = arith.constant 0 : index
      %c0_32 = arith.constant 0 : index
      %56 = vector.load %arg7[%c0_31, %c0_32] : memref<1x128xf32, #tpu.memory_space<vmem>>, vector<1x128xf32>
      %57 = vector.broadcast %56 : vector<1x128xf32> to vector<16x128xf32>
      %58 = arith.mulf %55, %57 : vector<16x128xf32>
      %c0_33 = arith.constant 0 : index
      %c0_34 = arith.constant 0 : index
      %59 = vector.load %arg8[%c0_33, %c0_34] : memref<1x128xf32, #tpu.memory_space<vmem>>, vector<1x128xf32>
      %60 = vector.broadcast %59 : vector<1x128xf32> to vector<16x128xf32>
      %61 = arith.addf %58, %60 : vector<16x128xf32>
      %cst_35 = arith.constant 5.000000e-01 : f32
      %62 = vector.broadcast %cst_35 : f32 to vector<16x128xf32>
      %63 = arith.mulf %62, %61 : vector<16x128xf32>
      %cst_36 = arith.constant 0.707106769 : f32
      %64 = vector.broadcast %cst_36 : f32 to vector<16x128xf32>
      %65 = arith.mulf %61, %64 : vector<16x128xf32>
      %66 = math.erf %65 : vector<16x128xf32>
      %cst_37 = arith.constant 1.000000e+00 : f32
      %67 = vector.broadcast %cst_37 : f32 to vector<16x128xf32>
      %68 = arith.addf %67, %66 : vector<16x128xf32>
      %69 = arith.mulf %63, %68 : vector<16x128xf32>
      %c0_38 = arith.constant 0 : index
      %c0_39 = arith.constant 0 : index
      %70 = vector.load %arg9[%c0_38, %c0_39] : memref<16x128xf32, #tpu.memory_space<vmem>>, vector<16x128xf32>
      tpu.vector_store %arg9[%c0_38, %c0_39], %69 {strides = array<i32>} : memref<16x128xf32, #tpu.memory_space<vmem>>, vector<16x128xf32>,
    } else {
    }
    return
  }
  func.func @transform_0(%arg0: i32, %arg1: i32) -> (i32, i32) {
    %c0_i32 = arith.constant 0 : i32
    %c0_i32_0 = arith.constant 0 : i32
    return %arg0, %c0_i32 : i32, i32
  }
  func.func @transform_1(%arg0: i32, %arg1: i32) -> (i32, i32) {
    %c0_i32 = arith.constant 0 : i32
    %c0_i32_0 = arith.constant 0 : i32
    return %c0_i32, %arg1 : i32, i32
  }
  func.func @transform_2(%arg0: i32, %arg1: i32) -> (i32, i32) {
    %c0_i32 = arith.constant 0 : i32
    %c0_i32_0 = arith.constant 0 : i32
    return %c0_i32, %arg1 : i32, i32
  }
  func.func @transform_3(%arg0: i32, %arg1: i32) -> (i32, i32) {
    %c0_i32 = arith.constant 0 : i32
    %c0_i32_0 = arith.constant 0 : i32
    return %arg1, %c0_i32 : i32, i32
  }
  func.func @transform_4(%arg0: i32, %arg1: i32) -> (i32, i32) {
    %c0_i32 = arith.constant 0 : i32
    %c0_i32_0 = arith.constant 0 : i32
    %c0_i32_1 = arith.constant 0 : i32
    return %c0_i32, %c0_i32_0 : i32, i32
  }
  func.func @transform_5(%arg0: i32, %arg1: i32) -> (i32, i32) {
    %c0_i32 = arith.constant 0 : i32
    %c0_i32_0 = arith.constant 0 : i32
    %c0_i32_1 = arith.constant 0 : i32
    return %c0_i32, %c0_i32_0 : i32, i32
  }
  func.func @transform_6(%arg0: i32, %arg1: i32) -> (i32, i32) {
    %c0_i32 = arith.constant 0 : i32
    %c0_i32_0 = arith.constant 0 : i32
    %c0_i32_1 = arith.constant 0 : i32
    return %c0_i32, %c0_i32_0 : i32, i32
  }
  func.func @transform_7(%arg0: i32, %arg1: i32) -> (i32, i32) {
    %c0_i32 = arith.constant 0 : i32
    %c0_i32_0 = arith.constant 0 : i32
    return %arg0, %c0_i32 : i32, i32
  }
}

</mosaic_0001>

<llo_original>
// kernel: tpu_custom_call.1
$region0: #{tpu_custom_call.1}
  #allocation0 [shape = 'u32[]', space=smem, size = 0x4, offset = 0x4, fixed_abs, tag = 'smem constant byte address 0x4 - core index']
  #allocation1 [shape = 'u32[144,128]{1,0:T(1,128)}', space=vmem, size = 0x12000, scoped, tag = 'internal scratch']
  #allocation2 [shape = 'f32[16,128]{1,0:T(8,128)}', space=vmem, size = 0x2000, scoped, tag = 'scratch operand']
  %s0 = inlined_call_operand.vmem [shape: f32[16,128], index: 0, kind: input, shape index: {}]
  %s1 = inlined_call_operand.vmem [shape: bf16[128,64], index: 1, kind: input, shape index: {}]
  %s2 = inlined_call_operand.vmem [shape: f32[1,64], index: 2, kind: input, shape index: {}]
  %s3 = inlined_call_operand.vmem [shape: bf16[64,128], index: 3, kind: input, shape index: {}]
  %s4 = inlined_call_operand.vmem [shape: f32[1,128], index: 4, kind: input, shape index: {}]
  %s5 = inlined_call_operand.vmem [shape: f32[1,128], index: 5, kind: input, shape index: {}]
  %s6 = inlined_call_operand.vmem [shape: f32[1,128], index: 6, kind: input, shape index: {}]
  %s7 = inlined_call_operand.hbm [shape: f32[16,128], index: 7, kind: output, shape index: {}]
  %s8 = sld [smem:[#allocation0]]
  $region46: #{tpu_custom_call.1} parent=0
    _
  %s10 = ssub.s32 1, %s8
  %s11 = scalar_select 0, %s10, %s8
  $region1: #{tpu_custom_call.1} parent=0
    #allocation3 [shape = 'u8[8192]{0}', space=vmem, size = 0x2000, scoped, tag = 'output window, operand 0, single buffered']
    #allocation4 [shape = 's32[1]{0}', space=sflag, size = 0x4, scoped, tag = 'scoped memory for tpu_custom_call.1']
    %12 = vsyncpa [#allocation4], 0
    // Predicated region
    $region2: #{tpu_custom_call.1} parent=1 // pred_check
      _
    $region3: #{tpu_custom_call.1} parent=1 // pred_check_branch
      %14 = sbr.rel (0) target = $region5
    $region4: #{tpu_custom_call.1} parent=1 // pred_region
      _
    $region5: #{tpu_custom_call.1} parent=1 // pred_fallthru
      _
    // Predicated region
    $region6: #{tpu_custom_call.1} parent=1 // pred_check
      _
    $region7: #{tpu_custom_call.1} parent=1 // pred_check_branch
      %16 = sbr.rel (0) target = $region9
    $region8: #{tpu_custom_call.1} parent=1 // pred_region
      _
    $region9: #{tpu_custom_call.1} parent=1 // pred_fallthru
      _
    // Predicated region
    $region10: #{tpu_custom_call.1} parent=1 // pred_check
      _
    $region11: #{tpu_custom_call.1} parent=1 // pred_check_branch
      %18 = sbr.rel (0) target = $region13
    $region12: #{tpu_custom_call.1} parent=1 // pred_region
      _
    $region13: #{tpu_custom_call.1} parent=1 // pred_fallthru
      _
    // Predicated region
    $region14: #{tpu_custom_call.1} parent=1 // pred_check
      _
    $region15: #{tpu_custom_call.1} parent=1 // pred_check_branch
      %20 = sbr.rel (0) target = $region17
    $region16: #{tpu_custom_call.1} parent=1 // pred_region
      _
    $region17: #{tpu_custom_call.1} parent=1 // pred_fallthru
      _
    // Predicated region
    $region18: #{tpu_custom_call.1} parent=1 // pred_check
      _
    $region19: #{tpu_custom_call.1} parent=1 // pred_check_branch
      %22 = sbr.rel (0) target = $region21
    $region20: #{tpu_custom_call.1} parent=1 // pred_region
      _
    $region21: #{tpu_custom_call.1} parent=1 // pred_fallthru
      _
    // Predicated region
    $region22: #{tpu_custom_call.1} parent=1 // pred_check
      _
    $region23: #{tpu_custom_call.1} parent=1 // pred_check_branch
      %24 = sbr.rel (0) target = $region25
    $region24: #{tpu_custom_call.1} parent=1 // pred_region
      _
    $region25: #{tpu_custom_call.1} parent=1 // pred_fallthru
      _
    // Predicated region
    $region26: #{tpu_custom_call.1} parent=1 // pred_check
      _
    $region27: #{tpu_custom_call.1} parent=1 // pred_check_branch
      %26 = sbr.rel (0) target = $region29
    $region28: #{tpu_custom_call.1} parent=1 // pred_region
      _
    $region29: #{tpu_custom_call.1} parent=1 // pred_fallthru
      _
    %p28 = scmp.eq.s32.totalorder 0, 0
    // Predicated region
    $region30: #{tpu_custom_call.1} parent=1 // pred_check
      %p29 = pneg %p28
    $region31: #{tpu_custom_call.1} parent=1 // pred_check_branch
      %31 = sbr.rel (%p29) target = $region33
    $region32: #{tpu_custom_call.1} parent=1 // pred_region
      %32 = vst [vmem:[#allocation2] sm:$0xff] 0.0
      %33 = vst [vmem:[#allocation2 + $0x8] sm:$0xff] 0.0
    $region33: #{tpu_custom_call.1} parent=1 // pred_fallthru
      _
    %v34 = vld [vmem:[%s0] sm:$0xff]
    %v35 = vld [vmem:[%s0 + $0x8] sm:$0xff]
    %v36 = vpack.c.bf16 %v35, %v34
    %v37 = vld [vmem:[%s1] sm:$0xf]
    %v38 = vld [vmem:[%s1 + $0x4] sm:$0xf]
    %v39 = vld [vmem:[%s1 + $0x8] sm:$0xf]
    %v40 = vld [vmem:[%s1 + $0xc] sm:$0xf]
    %v41 = vld [vmem:[%s1 + $0x10] sm:$0xf]
    %v42 = vld [vmem:[%s1 + $0x14] sm:$0xf]
    %v43 = vld [vmem:[%s1 + $0x18] sm:$0xf]
    %v44 = vld [vmem:[%s1 + $0x1c] sm:$0xf]
    %v45 = vld [vmem:[%s1 + $0x20] sm:$0xf]
    %v46 = vld [vmem:[%s1 + $0x24] sm:$0xf]
    %v47 = vld [vmem:[%s1 + $0x28] sm:$0xf]
    %v48 = vld [vmem:[%s1 + $0x2c] sm:$0xf]
    %v49 = vld [vmem:[%s1 + $0x30] sm:$0xf]
    %v50 = vld [vmem:[%s1 + $0x34] sm:$0xf]
    %v51 = vld [vmem:[%s1 + $0x38] sm:$0xf]
    %v52 = vld [vmem:[%s1 + $0x3c] sm:$0xf]
    %v53 = vld [vmem:[%s2] sm:$0x1]
    %v55 = vlaneseq
    %v56 = vshrl.u32 %v55, 7
    %v57 = vsub.s32 0, %v56
    %v58 = vrot.slane %v53, %v57
    %v76 = vunpack.c.l.b16 %v37
    %v77 = vunpack.c.l.b16 %v38
    %v78 = vunpack.c.l.b16 %v39
    %v79 = vunpack.c.l.b16 %v40
    %v80 = vunpack.c.l.b16 %v41
    %v81 = vunpack.c.l.b16 %v42
    %v82 = vunpack.c.l.b16 %v43
    %v83 = vunpack.c.l.b16 %v44
    %v84 = vunpack.c.l.b16 %v45
    %v85 = vunpack.c.l.b16 %v46
    %v86 = vunpack.c.l.b16 %v47
    %v87 = vunpack.c.l.b16 %v48
    %v88 = vunpack.c.l.b16 %v49
    %v89 = vunpack.c.l.b16 %v50
    %v90 = vunpack.c.l.b16 %v51
    %v91 = vunpack.c.l.b16 %v52
    %v92 = vpack.c.b16 %v77, %v76
    %v93 = vpack.c.b16 %v79, %v78
    %v94 = vpack.c.b16 %v81, %v80
    %v95 = vpack.c.b16 %v83, %v82
    %v96 = vpack.c.b16 %v85, %v84
    %v97 = vpack.c.b16 %v87, %v86
    %v98 = vpack.c.b16 %v89, %v88
    %v99 = vpack.c.b16 %v91, %v90
    %108 = vmatprep.subr.bf16.mxu0 0
    %109 = vmatpush1.bf16.msra.mxu0 %v99
    %110 = vmatprep.subr.bf16.mxu0 0
    %111 = vmatpush1.bf16.msra.mxu0 %v98
    %112 = vmatprep.subr.bf16.mxu0 0
    %113 = vmatpush1.bf16.msra.mxu0 %v97
    %114 = vmatprep.subr.bf16.mxu0 0
    %115 = vmatpush1.bf16.msra.mxu0 %v96
    %116 = vmatprep.subr.bf16.mxu0 0
    %117 = vmatpush1.bf16.msra.mxu0 %v95
    %118 = vmatprep.subr.bf16.mxu0 0
    %119 = vmatpush1.bf16.msra.mxu0 %v94
    %120 = vmatprep.subr.bf16.mxu0 0
    %121 = vmatpush1.bf16.msra.mxu0 %v93
    %122 = vmatprep.subr.bf16.mxu0 0
    %123 = vmatpush1.bf16.msra.mxu0 %v92
    %124 = vmatprep.subr.bf16.mxu0 0
    %125 = vmatpush2.bf16.msra.mxu0 0
    %126 = vmatprep.subr.bf16.mxu0 0
    %127 = vmatpush2.bf16.msra.mxu0 0
    %128 = vmatprep.subr.bf16.mxu0 0
    %129 = vmatpush2.bf16.msra.mxu0 0
    %130 = vmatprep.subr.bf16.mxu0 0
    %131 = vmatpush2.bf16.msra.mxu0 0
    %132 = vmatprep.subr.bf16.mxu0 0
    %133 = vmatpush2.bf16.msra.mxu0 0
    %134 = vmatprep.subr.bf16.mxu0 0
    %135 = vmatpush2.bf16.msra.mxu0 0
    %136 = vmatprep.subr.bf16.mxu0 0
    %137 = vmatpush2.bf16.msra.mxu0 0
    %138 = vmatprep.subr.bf16.mxu0 0
    %139 = vmatpush2.bf16.msra.mxu0 0
    %140 = vmatprep.mubr.bf16.mxu0 0
    %141 = vmatmul.mubr.bf16.gmra.mxu0 %v36
    %v142 = vpop.f32.mrf.mxu0
    %v143 = vadd.f32 %v58, %v142
    %v144 = vpop.f32.mrf.mxu0
    %v145 = vpop.f32.mrf.mxu0
    %v146 = vadd.f32 %v58, %v145
    %v147 = vpop.f32.mrf.mxu0
    %148 = vdwg.mxu0
    %v149 = vmul.f32 %v143, 0.5
    %v150 = vmul.f32 %v146, 0.5
    %v151 = vmul.f32 %v143, 0.70710677
    %v152 = vmul.f32 %v146, 0.70710677
    %v153 = verf.f32.pop %v151
    %v154 = verf.f32.pop %v152
    %v155 = vadd.f32 %v153, 1.0
    %v156 = vadd.f32 %v154, 1.0
    %v157 = vmul.f32 %v149, %v155
    %v158 = vmul.f32 %v150, %v156
    %v159 = vld [vmem:[#allocation2] sm:$0xff]
    %v160 = vld [vmem:[#allocation2 + $0x8] sm:$0xff]
    %v161 = vpack.c.bf16 %v158, %v157
    %v162 = vld [vmem:[%s3] sm:$0xf]
    %v163 = vld [vmem:[%s3 + $0x4] sm:$0xf]
    %v164 = vld [vmem:[%s3 + $0x8] sm:$0xf]
    %v165 = vld [vmem:[%s3 + $0xc] sm:$0xf]
    %v166 = vld [vmem:[%s3 + $0x10] sm:$0xf]
    %v167 = vld [vmem:[%s3 + $0x14] sm:$0xf]
    %v168 = vld [vmem:[%s3 + $0x18] sm:$0xf]
    %v169 = vld [vmem:[%s3 + $0x1c] sm:$0xf]
    %v178 = vunpack.c.l.b16 %v162
    %v179 = vunpack.c.l.b16 %v163
    %v180 = vunpack.c.l.b16 %v164
    %v181 = vunpack.c.l.b16 %v165
    %v182 = vunpack.c.l.b16 %v166
    %v183 = vunpack.c.l.b16 %v167
    %v184 = vunpack.c.l.b16 %v168
    %v185 = vunpack.c.l.b16 %v169
    %v186 = vpack.c.b16 %v179, %v178
    %v187 = vpack.c.b16 %v181, %v180
    %v188 = vpack.c.b16 %v183, %v182
    %v189 = vpack.c.b16 %v185, %v184
    %vm194 = vcmask 523264
    %v196 = vsel %vm194, %v161, 0
    %198 = vmatprep.subr.bf16.mxu0 0
    %199 = vmatpush1.bf16.msra.mxu0 0
    %200 = vmatprep.subr.bf16.mxu0 0
    %201 = vmatpush1.bf16.msra.mxu0 0
    %202 = vmatprep.subr.bf16.mxu0 0
    %203 = vmatpush1.bf16.msra.mxu0 0
    %204 = vmatprep.subr.bf16.mxu0 0
    %205 = vmatpush1.bf16.msra.mxu0 0
    %206 = vmatprep.subr.bf16.mxu0 0
    %207 = vmatpush1.bf16.msra.mxu0 %v189
    %208 = vmatprep.subr.bf16.mxu0 0
    %209 = vmatpush1.bf16.msra.mxu0 %v188
    %210 = vmatprep.subr.bf16.mxu0 0
    %211 = vmatpush1.bf16.msra.mxu0 %v187
    %212 = vmatprep.subr.bf16.mxu0 0
    %213 = vmatpush1.bf16.msra.mxu0 %v186
    %214 = vmatprep.subr.bf16.mxu0 0
    %215 = vmatpush2.bf16.msra.mxu0 0
    %216 = vmatprep.subr.bf16.mxu0 0
    %217 = vmatpush2.bf16.msra.mxu0 0
    %218 = vmatprep.subr.bf16.mxu0 0
    %219 = vmatpush2.bf16.msra.mxu0 0
    %220 = vmatprep.subr.bf16.mxu0 0
    %221 = vmatpush2.bf16.msra.mxu0 0
    %222 = vmatprep.subr.bf16.mxu0 0
    %223 = vmatpush2.bf16.msra.mxu0 0
    %224 = vmatprep.subr.bf16.mxu0 0
    %225 = vmatpush2.bf16.msra.mxu0 0
    %226 = vmatprep.subr.bf16.mxu0 0
    %227 = vmatpush2.bf16.msra.mxu0 0
    %228 = vmatprep.subr.bf16.mxu0 0
    %229 = vmatpush2.bf16.msra.mxu0 0
    %230 = vmatprep.mubr.bf16.mxu0 0
    %231 = vmatmul.mubr.bf16.gmra.mxu0 %v196
    %v232 = vpop.f32.mrf.mxu0
    %v233 = vadd.f32 0.0, %v232
    %v234 = vpop.f32.mrf.mxu0
    %v235 = vpop.f32.mrf.mxu0
    %v236 = vadd.f32 0.0, %v235
    %v237 = vpop.f32.mrf.mxu0
    %238 = vdwg.mxu0
    %v239 = vadd.f32 %v159, %v233
    %v240 = vadd.f32 %v160, %v236
    %241 = vst [vmem:[#allocation2] sm:$0xff] %v239
    %242 = vst [vmem:[#allocation2 + $0x8] sm:$0xff] %v240
    // Predicated region
    $region34: #{tpu_custom_call.1} parent=1 // pred_check
      %p243 = pneg %p28
    $region35: #{tpu_custom_call.1} parent=1 // pred_check_branch
      %245 = sbr.rel (%p243) target = $region37
    $region36: #{tpu_custom_call.1} parent=1 // pred_region
      %v246 = vld [vmem:[#allocation2] sm:$0xff]
      %v247 = vld [vmem:[#allocation2 + $0x8] sm:$0xff]
      %v248 = vld [vmem:[%s4] sm:$0x1]
      %v250 = vlaneseq
      %v251 = vshrl.u32 %v250, 7
      %v252 = vsub.s32 0, %v251
      %v253 = vrot.slane %v248, %v252
      %v255 = vadd.f32 %v246, %v253
      %v256 = vadd.f32 %v247, %v253
      %v257 = vld [vmem:[%s0] sm:$0xff]
      %v258 = vld [vmem:[%s0 + $0x8] sm:$0xff]
      %v259 = vadd.f32 %v255, %v257
      %v260 = vadd.f32 %v256, %v258
      %v261 = vlaneseq
      %v262 = vand.u32 %v261, 127
      %vm263 = vcmp.lt.s32.totalorder %v262, 32
      %v264 = vsel %vm263, %v259, 0.0
      %v265 = vsel %vm263, %v260, 0.0
      %266 = vadd.xlane.f32.xlu0 %v264
      %v267 = vpop.xlane.xlu0 %266
      %268 = vadd.xlane.f32.xlu0 %v265
      %v269 = vpop.xlane.xlu0 %268
      %v270 = vmul.f32 %v267, 0.03125
      %v271 = vmul.f32 %v269, 0.03125
      %v272 = vsub.f32 %v264, %v270
      %v273 = vsub.f32 %v265, %v271
      %v274 = vsel %vm263, %v272, 0.0
      %v275 = vsel %vm263, %v273, 0.0
      %v276 = vmul.f32 %v274, %v274
      %v277 = vmul.f32 %v275, %v275
      %278 = vadd.xlane.f32.xlu0 %v276
      %v279 = vpop.xlane.xlu0 %278
      %280 = vadd.xlane.f32.xlu0 %v277
      %v281 = vpop.xlane.xlu0 %280
      %v282 = vmul.f32 %v279, 0.03125
      %v283 = vmul.f32 %v281, 0.03125
      %v284 = vadd.f32 %v282, 1e-05
      %v285 = vadd.f32 %v283, 1e-05
      %v286 = vrsqrt.pop %v284
      %v287 = vrsqrt.pop %v285
      %v288 = vmul.f32 %v274, %v286
      %v289 = vmul.f32 %v275, %v287
      %v290 = vld [vmem:[%s5] sm:$0x1]
      %v292 = vlaneseq
      %v293 = vshrl.u32 %v292, 7
      %v294 = vsub.s32 0, %v293
      %v295 = vrot.slane %v290, %v294
      %v297 = vmul.f32 %v288, %v295
      %v298 = vmul.f32 %v289, %v295
      %v299 = vld [vmem:[%s6] sm:$0x1]
      %v301 = vlaneseq
      %v302 = vshrl.u32 %v301, 7
      %v303 = vsub.s32 0, %v302
      %v304 = vrot.slane %v299, %v303
      %v306 = vadd.f32 %v297, %v304
      %v307 = vadd.f32 %v298, %v304
      %v308 = vmul.f32 %v306, 0.5
      %v309 = vmul.f32 %v307, 0.5
      %v310 = vmul.f32 %v306, 0.70710677
      %v311 = vmul.f32 %v307, 0.70710677
      %v312 = verf.f32.pop %v310
      %v313 = verf.f32.pop %v311
      %v314 = vadd.f32 %v312, 1.0
      %v315 = vadd.f32 %v313, 1.0
      %v316 = vmul.f32 %v308, %v314
      %v317 = vmul.f32 %v309, %v315
      %318 = vst [vmem:[#allocation3] sm:$0xff] %v316
      %319 = vst [vmem:[#allocation3 + $0x8] sm:$0xff] %v317
    $region37: #{tpu_custom_call.1} parent=1 // pred_fallthru
      _
    // Predicated region
    $region38: #{tpu_custom_call.1} parent=1 // pred_check
      _
    $region39: #{tpu_custom_call.1} parent=1 // pred_check_branch
      %321 = sbr.rel (0) target = $region41
    $region40: #{tpu_custom_call.1} parent=1 // pred_region
      %s323 = ssub.s32 256, 256
      %324 = vsyncadd [#allocation4], %s323
      %s325 = sshll.u32 [#allocation3], 4
      %s326 = int_to_ptr.vmem [resolvable:$true] %s325
      %331 = dma.vmem_to_hbm [thread:$0]  %s326, 256, %s7, [#allocation4], 128, 128, 8
    $region41: #{tpu_custom_call.1} parent=1 // pred_fallthru
      _
    // Predicated region
    $region42: #{tpu_custom_call.1} parent=1 // pred_check
      _
    $region43: #{tpu_custom_call.1} parent=1 // pred_check_branch
      %333 = sbr.rel (0) target = $region45
    $region44: #{tpu_custom_call.1} parent=1 // pred_region
      %334 = dma.done [#allocation4], 256
    $region45: #{tpu_custom_call.1} parent=1 // pred_fallthru
      _
    %335 = vsyncpa [#allocation4], 1

</llo_original>
